<compile_context>
chip_gen: v6e
topology: v6e:2x2x1
jax: 0.10.0
libtpu: 0.0.40
codegen_flags: <defaults>
</compile_context>

<pallas_src>
import jax
import jax.numpy as jnp
from jax import lax
from jax.experimental import pallas as pl
from jax.experimental.pallas import tpu as pltpu

_LANES = 128      # vreg lane width
_SUBLANES = 8     # f32 vreg sublane count


def _make_sumsq_kernel(valid_rows, block_rows, chunks_per_core, needs_mask):
    """Partial sum-of-squares over a lane-dense (rows, 128) residual view.

    grid = (n_parallel, chunks_per_core):
      axis 0 -> independent partial sums (CORE_PARALLEL on v7x; size 1 else)
      axis 1 -> reduction over row chunks ("arbitrary")
    The (8,128) output block is VMEM-resident across axis 1 and doubles as the
    accumulator: zero-init at chunk 0, written back to HBM once at the end.
    """

    def kernel(x_ref, out_ref):
        p = pl.program_id(0)
        j = pl.program_id(1)

        @pl.when(j == 0)
        def _():
            out_ref[...] = jnp.zeros_like(out_ref)

        x = x_ref[...].astype(jnp.float32)
        sq = x * x

        if needs_mask:
            # Global row id of every row in this block.  Rows past the logical
            # end of the residual (Pallas boundary padding, or duplicated
            # clamped chunks in the multi-core path) contribute exactly zero.
            chunk = p * chunks_per_core + j
            rid = chunk * block_rows + lax.broadcasted_iota(jnp.int32, sq.shape, 0)
            sq = jnp.where(rid < valid_rows, sq, 0.0)

        # Collapse (block_rows, 128) into one (8, 128) slab: the leading-axis
        # split is layout-free and the reduction is pure VPU adds -- the single
        # cross-lane/sublane reduce happens outside the kernel, once.
        out_ref[...] += jnp.sum(sq.reshape(-1, _SUBLANES, _LANES), axis=0)

    return kernel


def condition_loss(residual, weight=1.0, *, tile_rows=8192, num_cores=1,
                   min_kernel_bytes=64 * 1024):
    """weight * mean(residual**2), the shared Condition loss reduction.

    Large, lane-aligned residuals are reduced by a Pallas TPU kernel that reads
    the residual exactly once (no wrapper-side pad/copy).  Tiny residuals and
    residuals whose element count is not a multiple of 128 use a single fused
    XLA reduction instead, which is one HBM pass and therefore faster than any
    pad-copy + kernel combination for those shapes.
    """
    x = jnp.asarray(residual)
    n = int(x.size)
    weight = jnp.asarray(weight, jnp.float32)
    itemsize = jnp.dtype(x.dtype).itemsize

    if n == 0 or n * itemsize < min_kernel_bytes or n % _LANES != 0:
        # Fused XLA fallback: single square+reduce pass, no extra copies.
        return weight * jnp.mean(jnp.square(x.astype(jnp.float32)))

    rows = n // _LANES
    x2d = x.reshape(rows, _LANES)            # lane-dense view, never padded

    # Dtype-aware rounding: multiples of 32 sublanes satisfy the min-tile
    # constraint for f32 (8,128), bf16 (16,128) and int8/fp8 (32,128).
    tile_rows = max(32, (int(tile_rows) // 32) * 32)
    block_rows = min(tile_rows, (rows // 32) * 32)

    n_parallel = max(1, int(num_cores))
    n_chunks = -(-rows // block_rows)                 # ceil
    chunks_per_core = -(-n_chunks // n_parallel)      # ceil
    covered_rows = n_parallel * chunks_per_core * block_rows
    needs_mask = covered_rows != rows

    if n_parallel == 1:
        in_map = lambda p, j: (j, 0)
        dim_sems = ("arbitrary", "arbitrary")
    else:
        # v7x: both TensorCores reduce disjoint chunk ranges.  Clamp the chunk
        # index so every DMA stays in bounds; duplicated (clamped) chunks are
        # fully masked to zero inside the kernel.
        last_chunk = n_chunks - 1
        cpc = chunks_per_core
        in_map = lambda p, j: (jnp.minimum(p * cpc + j, last_chunk), 0)
        dim_sems = (pltpu.CORE_PARALLEL, pltpu.ARBITRARY)

    block_bytes = block_rows * _LANES * itemsize
    # Explicit scoped-VMEM budget so large tiles also compile on v5e
    # (16 MiB default limit) while staying inside v7x's 64 MiB physical VMEM.
    vmem_limit = int(min(64 * 2**20, max(32 * 2**20, 2 * block_bytes + (4 << 20))))

    kernel = _make_sumsq_kernel(rows, block_rows, chunks_per_core, needs_mask)

    partials = pl.pallas_call(
        kernel,
        out_shape=jax.ShapeDtypeStruct((_SUBLANES * n_parallel, _LANES), jnp.float32),
        grid=(n_parallel, chunks_per_core),
        in_specs=[pl.BlockSpec((block_rows, _LANES), in_map)],
        out_specs=pl.BlockSpec((_SUBLANES, _LANES), lambda p, j: (p, 0)),
        compiler_params=pltpu.CompilerParams(
            dimension_semantics=dim_sems,
            vmem_limit_bytes=vmem_limit,
        ),
    )(x2d)

    # Weight and mean applied outside the kernel: one scalar multiply, and a
    # changing Condition.weight never forces a pallas_call retrace.
    return weight * (jnp.sum(partials) * (1.0 / n))


class Condition:
    """JAX/Pallas mirror of torchphysics.Condition.

    Holds name / weight / track_gradients; concrete subclasses supply the
    residual, and the shared numeric hot path (weight * mean(residual**2))
    runs through `condition_loss` above.
    """

    def __init__(self, name=None, weight=1.0, track_gradients=True):
        self.name = name
        self.weight = weight
        # TODO(synk): gradient-tracking flags are autograd bookkeeping with no
        # Pallas equivalent (JAX tracks gradients functionally via jax.grad).
        self.track_gradients = track_gradients

    def forward(self, residual):
        return condition_loss(residual, self.weight)

    __call__ = forward

    # TODO(synk): _track_gradients / _setup_data_functions are framework glue
    # (requires_grad flags, UserFunction / sampler registration) with no
    # tensor compute; intentionally not implemented.


if __name__ == "__main__":
    key = jax.random.PRNGKey(0)
    k1, k2, k3, k4 = jax.random.split(key, 4)

    def ref_loss(r, w):
        return jnp.asarray(w, jnp.float32) * jnp.mean(jnp.square(r.astype(jnp.float32)))

    # 1) Kernel path: multi-chunk reduction, rows divisible by block (no mask).
    res1 = jax.random.normal(k1, (2048, 64), dtype=jnp.float32)
    loss1 = jax.block_until_ready(condition_loss(res1, weight=2.0, tile_rows=256))
    assert jnp.allclose(loss1, ref_loss(res1, 2.0), rtol=1e-5, atol=1e-6), (loss1, ref_loss(res1, 2.0))

    # 2) Kernel path: partial last block exercises the in-kernel row mask
    #    (residual is never padded or copied in the wrapper).
    res2 = jax.random.normal(k2, (1200, 128), dtype=jnp.float32)
    loss2 = jax.block_until_ready(condition_loss(res2, weight=1.5, tile_rows=512))
    assert jnp.allclose(loss2, ref_loss(res2, 1.5), rtol=1e-5, atol=1e-6), (loss2, ref_loss(res2, 1.5))

    # 3) Kernel path: bf16 residual (half the HBM bytes), f32 accumulation.
    res3 = jax.random.normal(k3, (2048, 64), dtype=jnp.bfloat16)
    loss3 = jax.block_until_ready(condition_loss(res3, weight=1.0))
    assert jnp.allclose(loss3, ref_loss(res3, 1.0), rtol=2e-5, atol=1e-6), (loss3, ref_loss(res3, 1.0))

    # 4) Tiny / lane-ragged residual through the Condition module: fused XLA
    #    fallback (single pass, no kernel, no pad copy).
    res4 = jax.random.normal(k4, (100, 7), dtype=jnp.float32)
    cond = Condition(name="pinn_condition", weight=0.25)
    loss4 = jax.block_until_ready(cond(res4))
    assert jnp.allclose(loss4, ref_loss(res4, 0.25), rtol=1e-5, atol=1e-6), (loss4, ref_loss(res4, 0.25))

    print("KERNEL_OK")
</pallas_src>

<mosaic_0001>
module attributes {stable_mosaic.version = 11 : i64} {
  func.func @kernel(%arg0: i32, %arg1: i32, %arg2: memref<256x128xf32, #tpu.memory_space<vmem>>, %arg3: memref<8x128xf32, #tpu.memory_space<vmem>>) attributes {dimension_semantics = [#tpu.dimension_semantics<arbitrary>, #tpu.dimension_semantics<arbitrary>], iteration_bounds = array<i64: 1, 4>, scalar_prefetch = 0 : i64, scratch_operands = 0 : i64, tpu.core_type = #tpu.core_type<tc>, window_params = [{transform_indices = @transform_0, window_bounds = array<i64: 256, 128>}, {transform_indices = @transform_1, window_bounds = array<i64: 8, 128>}]} {
    %c0_i32 = arith.constant 0 : i32
    %0 = arith.cmpi eq, %arg1, %c0_i32 : i32
    %1 = arith.extui %0 : i1 to i32
    %c0_i32_0 = arith.constant 0 : i32
    %2 = arith.cmpi ne, %1, %c0_i32_0 : i32
    scf.if %2 {
      %cst_6 = arith.constant 0.000000e+00 : f32
      %10 = vector.broadcast %cst_6 : f32 to vector<8x128xf32>
      %c0_7 = arith.constant 0 : index
      %c0_8 = arith.constant 0 : index
      %11 = vector.load %arg3[%c0_7, %c0_8] : memref<8x128xf32, #tpu.memory_space<vmem>>, vector<8x128xf32>
      tpu.vector_store %arg3[%c0_7, %c0_8], %10 {strides = array<i32>} : memref<8x128xf32, #tpu.memory_space<vmem>>, vector<8x128xf32>,
    } else {
    }
    %c0 = arith.constant 0 : index
    %c0_1 = arith.constant 0 : index
    %3 = vector.load %arg2[%c0, %c0_1] : memref<256x128xf32, #tpu.memory_space<vmem>>, vector<256x128xf32>
    %4 = arith.mulf %3, %3 : vector<256x128xf32>
    %c0_2 = arith.constant 0 : index
    %c0_3 = arith.constant 0 : index
    %5 = vector.load %arg3[%c0_2, %c0_3] : memref<8x128xf32, #tpu.memory_space<vmem>>, vector<8x128xf32>
    %6 = vector.shape_cast %4 : vector<256x128xf32> to vector<32x8x128xf32>
    %cst = arith.constant dense<0.000000e+00> : vector<8x128xf32>
    %7 = vector.multi_reduction <add>, %6, %cst [0] : vector<32x8x128xf32> to vector<8x128xf32>
    %8 = arith.addf %5, %7 : vector<8x128xf32>
    %c0_4 = arith.constant 0 : index
    %c0_5 = arith.constant 0 : index
    %9 = vector.load %arg3[%c0_4, %c0_5] : memref<8x128xf32, #tpu.memory_space<vmem>>, vector<8x128xf32>
    tpu.vector_store %arg3[%c0_4, %c0_5], %8 {strides = array<i32>} : memref<8x128xf32, #tpu.memory_space<vmem>>, vector<8x128xf32>,
    return
  }
  func.func @transform_0(%arg0: i32, %arg1: i32) -> (i32, i32) {
    %c0_i32 = arith.constant 0 : i32
    %c0_i32_0 = arith.constant 0 : i32
    return %arg1, %c0_i32 : i32, i32
  }
  func.func @transform_1(%arg0: i32, %arg1: i32) -> (i32, i32) {
    %c0_i32 = arith.constant 0 : i32
    %c0_i32_0 = arith.constant 0 : i32
    return %arg0, %c0_i32 : i32, i32
  }
}

</mosaic_0001>

<llo_original>
// kernel: tpu_custom_call.1
$region0: #{tpu_custom_call.1}
  #allocation0 [shape = 'u32[]', space=smem, size = 0x4, offset = 0x4, fixed_abs, tag = 'smem constant byte address 0x4 - core index']
  #allocation1 [shape = 'u32[144,128]{1,0:T(1,128)}', space=vmem, size = 0x12000, scoped, tag = 'internal scratch']
  %s0 = inlined_call_operand.hbm [shape: f32[1024,128], index: 0, kind: input, shape index: {}]
  %s1 = inlined_call_operand.hbm [shape: f32[8,128], index: 1, kind: output, shape index: {}]
  %s2 = sld [smem:[#allocation0]]
  $region45: #{tpu_custom_call.1} parent=0
    _
  %s4 = ssub.s32 1, %s2
  %s5 = scalar_select 0, %s4, %s2
  $region1: #{tpu_custom_call.1} parent=0
    #allocation2 [shape = 'u8[262144]{0}', space=vmem, size = 0x40000, scoped, tag = 'input window, operand 0']
    #allocation3 [shape = 's32[2]{0}', space=sflag, size = 0x8, scoped, tag = 'scoped memory for tpu_custom_call.1']
    #allocation4 [shape = 's32[2]{0}', space=sflag, size = 0x8, scoped, tag = 'scoped memory for tpu_custom_call.1']
    #allocation5 [shape = 'u8[4096]{0}', space=vmem, size = 0x1000, scoped, tag = 'output window, operand 0, single buffered']
    %6 = vsyncpa [#allocation3], 0
    %s7 = scalar_lea.sflag [#allocation3], 1
    %8 = vsyncpa %s7, 0
    %9 = vsyncpa [#allocation4], 0
    loop: start=0, step=1, limit=6
    $region2: #{tpu_custom_call.1} parent=1 // loop_pre_header
      _
    $region3: #{tpu_custom_call.1} parent=1 // loop_header
      %s11 = sphi 0, %s15
      %p12 = scmp.ge.s32.totalorder %s11, 6
      %s18 = sphi 0, %s30
      %s19 = sphi 0, %s26
      %s20 = sphi 0, %s18
      %s21 = sphi 0, %s19
      %s22 = sphi 0, %s20
      %s23 = sphi 0, %s21
      %s33 = sphi 0, %s35
      %s36 = sphi 0, %s33
      %s37 = sphi 0, %s36
      %s53 = sphi 0, %s37
      %s59 = sphi 0, %s61
      %s62 = sphi 0, %s59
      %s63 = sphi 0, %s62
      %s79 = sphi 0, %s63
    $region4: #{tpu_custom_call.1} parent=1 // loop_header_branch
      %14 = sbr.rel (%p12) target = $region8
    $region5: #{tpu_custom_call.1} parent=1 // loop_body
      %s16 = ssub.s32 %s11, 1
      %s17 = ssub.s32 %s11, 2
      %s24 = sadd.s32 1, %s19
      %p25 = scmp.ge.s32.totalorder %s24, 4
      %s26 = scalar_select %p25, 0, %s24
      %s27 = sadd.s32 1, %s18
      %s28 = scalar_select %p25, %s27, %s18
      %p29 = scmp.ge.s32.totalorder %s28, 1
      %s30 = scalar_select %p29, 0, %s28
      %s31 = ssub.s32 %s19, %s26
      %p32 = scmp.eq.s32.totalorder %s31, 0
      %s34 = sadd.s32 %s33, 1
      %s35 = scalar_select %p32, %s33, %s34
      %p38 = pneg %p32
      %p39 = scmp.eq.s32.totalorder %s11, 3
      %p40 = por %p38, %p39
      %p41 = scmp.ne.s32.totalorder %s33, %s36
      %p42 = scmp.eq.s32.totalorder %s11, 0
      %p43 = por %p41, %p42
      %p44 = scmp.ne.s32.totalorder %s33, %s36
      %p45 = scmp.eq.s32.totalorder %s16, 3
      %p46 = por %p44, %p45
      %p47 = scmp.ne.s32.totalorder %s36, %s37
      %p48 = scmp.eq.s32.totalorder %s16, 0
      %p49 = por %p47, %p48
      %p50 = scmp.ne.s32.totalorder %s36, %s37
      %p51 = scmp.eq.s32.totalorder %s17, 3
      %p52 = por %p50, %p51
      %p54 = scmp.ne.s32.totalorder %s37, %s53
      %p55 = scmp.eq.s32.totalorder %s17, 0
      %p56 = por %p54, %p55
      %s57 = ssub.s32 %s18, %s30
      %p58 = scmp.eq.s32.totalorder %s57, 0
      %s60 = sadd.s32 %s59, 1
      %s61 = scalar_select %p58, %s59, %s60
      %p64 = pneg %p58
      %p65 = scmp.eq.s32.totalorder %s11, 3
      %p66 = por %p64, %p65
      %p67 = scmp.ne.s32.totalorder %s59, %s62
      %p68 = scmp.eq.s32.totalorder %s11, 0
      %p69 = por %p67, %p68
      %p70 = scmp.ne.s32.totalorder %s59, %s62
      %p71 = scmp.eq.s32.totalorder %s16, 3
      %p72 = por %p70, %p71
      %p73 = scmp.ne.s32.totalorder %s62, %s63
      %p74 = scmp.eq.s32.totalorder %s16, 0
      %p75 = por %p73, %p74
      %p76 = scmp.ne.s32.totalorder %s62, %s63
      %p77 = scmp.eq.s32.totalorder %s17, 3
      %p78 = por %p76, %p77
      %p80 = scmp.ne.s32.totalorder %s63, %s79
      %p81 = scmp.eq.s32.totalorder %s17, 0
      %p82 = por %p80, %p81
      %p83 = scmp.le.s32.totalorder 1, %s11
      %p84 = scmp.lt.s32.totalorder %s11, 5
      %p85 = pnand %p83, %p84
      %p86 = pneg %p85
      // Predicated region
      $region9: #{tpu_custom_call.1} parent=5 // pred_check
        _
      $region10: #{tpu_custom_call.1} parent=5 // pred_check_branch
        %88 = sbr.rel (%p85) target = $region12
      $region11: #{tpu_custom_call.1} parent=5 // pred_region
        %s89 = ssub.s32 %s11, 1
      $region12: #{tpu_custom_call.1} parent=5 // pred_fallthru
        _
      %p90 = scmp.lt.s32.totalorder %s11, 4
      // Predicated region
      $region13: #{tpu_custom_call.1} parent=5 // pred_check
        %p91 = pneg %p90
      $region14: #{tpu_custom_call.1} parent=5 // pred_check_branch
        %93 = sbr.rel (%p91) target = $region16
      $region15: #{tpu_custom_call.1} parent=5 // pred_region
        // Predicated region
        $region17: #{tpu_custom_call.1} parent=15 // pred_check
          %p94 = pneg %p43
        $region18: #{tpu_custom_call.1} parent=15 // pred_check_branch
          %96 = sbr.rel (%p94) target = $region20
        $region19: #{tpu_custom_call.1} parent=15 // pred_region
          %s97 = sand.u32 %s33, 1
          %s98 = scalar_lea.sflag [#allocation3], %s97
          %s99 = sand.u32 %s33, 1
          %s100 = smul.addr %s99, 256
          %s101 = scalar_lea.vmem [#allocation2], %s100
          %s102 = smul.u32 32, %s19
          %s104 = ssub.s32 4096, 4096
          %105 = vsyncadd %s98, %s104
          %s106 = smul.addr %s102, 128
          %s107 = scalar_lea.hbm %s0, %s106
          %s108 = sshll.u32 %s101, 4
          %s109 = int_to_ptr.vmem [resolvable:$true] %s108
          %114 = dma.hbm_to_vmem [thread:$0]  %s107, 4096, %s109, %s98, 128, 128, 8
        $region20: #{tpu_custom_call.1} parent=15 // pred_fallthru
          _
      $region16: #{tpu_custom_call.1} parent=5 // pred_fallthru
        _
      %p115 = scmp.le.s32.totalorder 1, %s11
      %p116 = scmp.lt.s32.totalorder %s11, 5
      %p117 = pnand %p115, %p116
      %p118 = pneg %p117
      // Predicated region
      $region21: #{tpu_custom_call.1} parent=5 // pred_check
        _
      $region22: #{tpu_custom_call.1} parent=5 // pred_check_branch
        %120 = sbr.rel (%p117) target = $region24
      $region23: #{tpu_custom_call.1} parent=5 // pred_region
        %s121 = ssub.s32 %s11, 1
        %s122 = sand.u32 %s36, 1
        %s123 = scalar_lea.sflag [#allocation3], %s122
        %s124 = sand.u32 %s36, 1
        %s125 = smul.addr %s124, 256
        %s126 = scalar_lea.vmem [#allocation2], %s125
        // Predicated region
        $region25: #{tpu_custom_call.1} parent=23 // pred_check
          %p127 = pneg %p49
        $region26: #{tpu_custom_call.1} parent=23 // pred_check_branch
          %129 = sbr.rel (%p127) target = $region28
        $region27: #{tpu_custom_call.1} parent=23 // pred_region
          %130 = dma.done %s123, 4096
        $region28: #{tpu_custom_call.1} parent=23 // pred_fallthru
          _
        %s131 = sand.u32 %s36, 1
        %s132 = scalar_lea.sflag [#allocation3], %s131
        %s133 = sand.u32 %s36, 1
        %s134 = smul.addr %s133, 256
        %s135 = scalar_lea.vmem [#allocation2], %s134
        %p136 = pneg %p49
        %p137 = pneg %p46
        %p138 = pneg %p75
        %p139 = pneg %p72
        %s140 = smul.u32 32, %s21
        %p141 = scmp.eq.s32.totalorder %s21, 0
        // Predicated region
        $region29: #{tpu_custom_call.1} parent=23 // pred_check
          %p142 = pneg %p141
        $region30: #{tpu_custom_call.1} parent=23 // pred_check_branch
          %144 = sbr.rel (%p142) target = $region32
        $region31: #{tpu_custom_call.1} parent=23 // pred_region
          %145 = vst [vmem:[#allocation5] sm:$0xff] 0.0
        $region32: #{tpu_custom_call.1} parent=23 // pred_fallthru
          _
        %v146 = vld [vmem:[%s126] sm:$0xff]
        %v147 = vld [vmem:[%s126 + $0x8] sm:$0xff]
        %v148 = vld [vmem:[%s126 + $0x10] sm:$0xff]
        %v149 = vld [vmem:[%s126 + $0x18] sm:$0xff]
        %v150 = vld [vmem:[%s126 + $0x20] sm:$0xff]
        %v151 = vld [vmem:[%s126 + $0x28] sm:$0xff]
        %v152 = vld [vmem:[%s126 + $0x30] sm:$0xff]
        %v153 = vld [vmem:[%s126 + $0x38] sm:$0xff]
        %v154 = vld [vmem:[%s126 + $0x40] sm:$0xff]
        %v155 = vld [vmem:[%s126 + $0x48] sm:$0xff]
        %v156 = vld [vmem:[%s126 + $0x50] sm:$0xff]
        %v157 = vld [vmem:[%s126 + $0x58] sm:$0xff]
        %v158 = vld [vmem:[%s126 + $0x60] sm:$0xff]
        %v159 = vld [vmem:[%s126 + $0x68] sm:$0xff]
        %v160 = vld [vmem:[%s126 + $0x70] sm:$0xff]
        %v161 = vld [vmem:[%s126 + $0x78] sm:$0xff]
        %v162 = vld [vmem:[%s126 + $0x80] sm:$0xff]
        %v163 = vld [vmem:[%s126 + $0x88] sm:$0xff]
        %v164 = vld [vmem:[%s126 + $0x90] sm:$0xff]
        %v165 = vld [vmem:[%s126 + $0x98] sm:$0xff]
        %v166 = vld [vmem:[%s126 + $0xa0] sm:$0xff]
        %v167 = vld [vmem:[%s126 + $0xa8] sm:$0xff]
        %v168 = vld [vmem:[%s126 + $0xb0] sm:$0xff]
        %v169 = vld [vmem:[%s126 + $0xb8] sm:$0xff]
        %v170 = vld [vmem:[%s126 + $0xc0] sm:$0xff]
        %v171 = vld [vmem:[%s126 + $0xc8] sm:$0xff]
        %v172 = vld [vmem:[%s126 + $0xd0] sm:$0xff]
        %v173 = vld [vmem:[%s126 + $0xd8] sm:$0xff]
        %v174 = vld [vmem:[%s126 + $0xe0] sm:$0xff]
        %v175 = vld [vmem:[%s126 + $0xe8] sm:$0xff]
        %v176 = vld [vmem:[%s126 + $0xf0] sm:$0xff]
        %v177 = vld [vmem:[%s126 + $0xf8] sm:$0xff]
        %v178 = vmul.f32 %v146, %v146
        %v179 = vmul.f32 %v147, %v147
        %v180 = vmul.f32 %v148, %v148
        %v181 = vmul.f32 %v149, %v149
        %v182 = vmul.f32 %v150, %v150
        %v183 = vmul.f32 %v151, %v151
        %v184 = vmul.f32 %v152, %v152
        %v185 = vmul.f32 %v153, %v153
        %v186 = vmul.f32 %v154, %v154
        %v187 = vmul.f32 %v155, %v155
        %v188 = vmul.f32 %v156, %v156
        %v189 = vmul.f32 %v157, %v157
        %v190 = vmul.f32 %v158, %v158
        %v191 = vmul.f32 %v159, %v159
        %v192 = vmul.f32 %v160, %v160
        %v193 = vmul.f32 %v161, %v161
        %v194 = vmul.f32 %v162, %v162
        %v195 = vmul.f32 %v163, %v163
        %v196 = vmul.f32 %v164, %v164
        %v197 = vmul.f32 %v165, %v165
        %v198 = vmul.f32 %v166, %v166
        %v199 = vmul.f32 %v167, %v167
        %v200 = vmul.f32 %v168, %v168
        %v201 = vmul.f32 %v169, %v169
        %v202 = vmul.f32 %v170, %v170
        %v203 = vmul.f32 %v171, %v171
        %v204 = vmul.f32 %v172, %v172
        %v205 = vmul.f32 %v173, %v173
        %v206 = vmul.f32 %v174, %v174
        %v207 = vmul.f32 %v175, %v175
        %v208 = vmul.f32 %v176, %v176
        %v209 = vmul.f32 %v177, %v177
        %v210 = vld [vmem:[#allocation5] sm:$0xff]
        %v211 = vadd.f32 %v178, %v179
        %v212 = vadd.f32 %v211, %v180
        %v213 = vadd.f32 %v212, %v181
        %v214 = vadd.f32 %v213, %v182
        %v215 = vadd.f32 %v214, %v183
        %v216 = vadd.f32 %v215, %v184
        %v217 = vadd.f32 %v216, %v185
        %v218 = vadd.f32 %v217, %v186
        %v219 = vadd.f32 %v218, %v187
        %v220 = vadd.f32 %v219, %v188
        %v221 = vadd.f32 %v220, %v189
        %v222 = vadd.f32 %v221, %v190
        %v223 = vadd.f32 %v222, %v191
        %v224 = vadd.f32 %v223, %v192
        %v225 = vadd.f32 %v224, %v193
        %v226 = vadd.f32 %v225, %v194
        %v227 = vadd.f32 %v226, %v195
        %v228 = vadd.f32 %v227, %v196
        %v229 = vadd.f32 %v228, %v197
        %v230 = vadd.f32 %v229, %v198
        %v231 = vadd.f32 %v230, %v199
        %v232 = vadd.f32 %v231, %v200
        %v233 = vadd.f32 %v232, %v201
        %v234 = vadd.f32 %v233, %v202
        %v235 = vadd.f32 %v234, %v203
        %v236 = vadd.f32 %v235, %v204
        %v237 = vadd.f32 %v236, %v205
        %v238 = vadd.f32 %v237, %v206
        %v239 = vadd.f32 %v238, %v207
        %v240 = vadd.f32 %v239, %v208
        %v241 = vadd.f32 %v240, %v209
        %v242 = vadd.f32 %v210, %v241
        %243 = vst [vmem:[#allocation5] sm:$0xff] %v242
        // Predicated region
        $region33: #{tpu_custom_call.1} parent=23 // pred_check
          %p244 = pneg %p72
        $region34: #{tpu_custom_call.1} parent=23 // pred_check_branch
          %246 = sbr.rel (%p244) target = $region36
        $region35: #{tpu_custom_call.1} parent=23 // pred_region
          %s248 = ssub.s32 128, 128
          %249 = vsyncadd [#allocation4], %s248
          %s250 = smul.addr %s20, 128
          %s251 = scalar_lea.hbm %s1, %s250
          %s253 = sshll.u32 [#allocation5], 4
          %s254 = int_to_ptr.vmem [resolvable:$true] %s253
          %256 = dma.vmem_to_hbm [thread:$0]  %s254, 128, %s251, [#allocation4]
        $region36: #{tpu_custom_call.1} parent=23 // pred_fallthru
          _
        // Predicated region
        $region37: #{tpu_custom_call.1} parent=23 // pred_check
          %p257 = pneg %p72
        $region38: #{tpu_custom_call.1} parent=23 // pred_check_branch
          %259 = sbr.rel (%p257) target = $region40
        $region39: #{tpu_custom_call.1} parent=23 // pred_region
          %260 = dma.done [#allocation4], 128
        $region40: #{tpu_custom_call.1} parent=23 // pred_fallthru
          _
      $region24: #{tpu_custom_call.1} parent=5 // pred_fallthru
        _
      %p261 = scmp.le.s32.totalorder 2, %s11
      // Predicated region
      $region41: #{tpu_custom_call.1} parent=5 // pred_check
        %p262 = pneg %p261
      $region42: #{tpu_custom_call.1} parent=5 // pred_check_branch
        %264 = sbr.rel (%p262) target = $region44
      $region43: #{tpu_custom_call.1} parent=5 // pred_region
        %s265 = ssub.s32 %s11, 2
      $region44: #{tpu_custom_call.1} parent=5 // pred_fallthru
        _
    $region6: #{tpu_custom_call.1} parent=1 // loop_footer
      %s15 = sadd.s32 1, %s11
    $region7: #{tpu_custom_call.1} parent=1 // loop_footer_branch
      %10 = sbr.rel target = $region3
    $region8: #{tpu_custom_call.1} parent=1 // loop_exit
      _
    %266 = vsyncpa [#allocation3], 1
    %s267 = scalar_lea.sflag [#allocation3], 1
    %268 = vsyncpa %s267, 1
    %269 = vsyncpa [#allocation4], 1
    %s270 = scalar_lea.sflag [#allocation4], 1
    %271 = vsyncpa %s270, 1

</llo_original>
